<compile_context>
chip_gen: v6e
topology: v6e:2x2x1
jax: 0.10.0
libtpu: 0.0.40
codegen_flags: <defaults>
</compile_context>

<pallas_src>
import jax
import jax.numpy as jnp
from jax.experimental import pallas as pl
from jax.experimental.pallas import tpu as pltpu

EPS = 1e-5  # PyTorch InstanceNorm1d default eps


def _residual_block_kernel(x_ref, w1_ref, w2_ref, o_ref):
    """One grid step over a (nb, C, L) block of samples.

    w*_ref: (C, 3C) packed conv weights, columns ordered [tap0 | tap1 | tap2].
    """
    nb, C, L = x_ref.shape
    w1 = w1_ref[...]            # hoisted: loaded once per grid step
    w2 = w2_ref[...]
    inv_l = 1.0 / L

    def conv3(t, wp):
        # t: (C, L) f32.  Reflection-padded 3-tap conv as a single matmul over
        # the stacked shifted taps (3C, L).
        left = jnp.concatenate([t[:, 1:2], t[:, : L - 1]], axis=1)        # tap0: x[l-1]; col0 -> x[1]
        right = jnp.concatenate([t[:, 1:], t[:, L - 2 : L - 1]], axis=1)  # tap2: x[l+1]; col L-1 -> x[L-2]
        stacked = jnp.concatenate([left, t, right], axis=0)               # (3C, L)
        return jnp.dot(wp, stacked.astype(wp.dtype),
                       preferred_element_type=jnp.float32)                # (C, L) f32

    def instance_norm(t):
        # One-pass statistics over L (biased variance, matching PyTorch).
        s = jnp.sum(t, axis=1, keepdims=True)
        ss = jnp.sum(t * t, axis=1, keepdims=True)
        mean = s * inv_l
        var = jnp.maximum(ss * inv_l - mean * mean, 0.0)
        return (t - mean) * jax.lax.rsqrt(var + EPS)

    for b in range(nb):                       # static unroll over the sample block
        x = x_ref[b].astype(jnp.float32)      # (C, L)
        y = conv3(x, w1)                      # conv bias exactly cancelled by norm
        y = jnp.maximum(instance_norm(y), 0.0)
        y = conv3(y, w2)
        y = instance_norm(y)
        o_ref[b] = (x + y).astype(o_ref.dtype)


def _pick_samples_per_block(n, c, l, itemsize, budget_bytes=2 << 20, max_nb=8):
    """Largest divisor of n (<= max_nb) whose activation block fits the budget,
    keeping >= 2 grid steps when n >= 2 (so v7x can use both TensorCores)."""
    per_sample = c * l * itemsize
    best = 1
    for nb in range(1, min(n, max_nb) + 1):
        if n % nb:
            continue
        if nb * per_sample > budget_bytes:
            continue
        if n >= 2 and n // nb < 2:
            continue
        best = nb
    return best


def residual_block(x, w1, b1, w2, b2, *, matmul_dtype=None, samples_per_block=None):
    """Pallas TPU forward of the PyTorch ResidualBlock.

    x:  (N, C, L) activations (NCL, like torch Conv1d)
    w*: (C, C, 3) Conv1d weights;  b*: (C,) Conv1d biases.

    Biases are accepted for parity with the PyTorch module but are not sent to
    the kernel: InstanceNorm1d(affine=False) removes the per-channel mean right
    after each conv, so the bias cancels exactly.

    matmul_dtype: optional reduced precision (e.g. jnp.bfloat16) for the MXU
    operands on v6e/v7x; accumulation stays f32.  Default keeps full f32 so the
    output matches the fp32 PyTorch reference tightly.
    """
    n, c, l = x.shape
    assert l >= 2, "ReflectionPad1d(1) requires length >= 2"
    assert w1.shape == (c, c, 3) and w2.shape == (c, c, 3)

    # Pack weights to (C_out, 3*C_in) with columns [W[:,:,0] | W[:,:,1] | W[:,:,2]]
    # matching the in-kernel [tap0; tap1; tap2] stacking along the contraction.
    w_dtype = jnp.float32 if matmul_dtype is None else matmul_dtype
    w1p = jnp.transpose(w1, (0, 2, 1)).reshape(c, 3 * c).astype(w_dtype)
    w2p = jnp.transpose(w2, (0, 2, 1)).reshape(c, 3 * c).astype(w_dtype)
    del b1, b2  # mathematically a no-op through the following InstanceNorm1d

    if samples_per_block is None:
        samples_per_block = _pick_samples_per_block(n, c, l, x.dtype.itemsize)
    nb = samples_per_block
    assert n % nb == 0, "samples_per_block must divide the batch size"

    # VMEM budget: double-buffered in/out activation blocks, resident packed
    # weights (pipeline double-buffers them), plus in-kernel f32 temporaries
    # (stacked taps ~3x, conv output, norm).  The block heuristic keeps this
    # small; the limit is stated explicitly and capped for v7x's 64 MiB VMEM.
    act_bytes = nb * c * l * 4
    weight_bytes = 2 * 2 * (c * 3 * c) * jnp.dtype(w_dtype).itemsize
    vmem_limit = int(min(max(32 << 20, 16 * act_bytes + weight_bytes), 64 << 20))

    return pl.pallas_call(
        _residual_block_kernel,
        out_shape=jax.ShapeDtypeStruct((n, c, l), x.dtype),
        grid_spec=pltpu.PrefetchScalarGridSpec(
            num_scalar_prefetch=0,
            grid=(n // nb,),
            in_specs=[
                pl.BlockSpec((nb, c, l), lambda i: (i, 0, 0)),   # activations
                pl.BlockSpec((c, 3 * c), lambda i: (0, 0)),      # packed w1 (resident)
                pl.BlockSpec((c, 3 * c), lambda i: (0, 0)),      # packed w2 (resident)
            ],
            out_specs=pl.BlockSpec((nb, c, l), lambda i: (i, 0, 0)),
        ),
        compiler_params=pltpu.CompilerParams(
            dimension_semantics=("parallel",),
            vmem_limit_bytes=vmem_limit,
        ),
    )(x, w1p, w2p)


def _reference(x, w1, b1, w2, b2):
    """Pure-JAX mirror of the PyTorch forward (includes conv biases)."""
    def conv3(t, w, b):
        tp = jnp.pad(t, ((0, 0), (0, 0), (1, 1)), mode="reflect")
        L = t.shape[-1]
        out = jnp.zeros_like(t)
        for k in range(3):
            out = out + jnp.einsum("oi,nil->nol", w[:, :, k], tp[:, :, k:k + L])
        return out + b[None, :, None]

    def inorm(t):
        m = jnp.mean(t, axis=-1, keepdims=True)
        v = jnp.mean((t - m) ** 2, axis=-1, keepdims=True)
        return (t - m) / jnp.sqrt(v + EPS)

    y = conv3(x, w1, b1)
    y = jnp.maximum(inorm(y), 0.0)
    y = conv3(y, w2, b2)
    y = inorm(y)
    return x + y


if __name__ == "__main__":
    N, C, L = 2, 4, 16
    key = jax.random.PRNGKey(0)
    kx, k1, k2, k3, k4 = jax.random.split(key, 5)

    x = jax.random.normal(kx, (N, C, L), dtype=jnp.float32)
    # Conv1d(C, C, 3) parameters: weight (C, C, 3) + bias (C,)
    scale = 1.0 / jnp.sqrt(jnp.float32(C * 3))
    w1 = jax.random.uniform(k1, (C, C, 3), jnp.float32, -scale, scale)
    b1 = jax.random.uniform(k2, (C,), jnp.float32, -scale, scale)
    w2 = jax.random.uniform(k3, (C, C, 3), jnp.float32, -scale, scale)
    b2 = jax.random.uniform(k4, (C,), jnp.float32, -scale, scale)

    out = jax.block_until_ready(residual_block(x, w1, b1, w2, b2))
    ref = _reference(x, w1, b1, w2, b2)

    assert out.shape == (N, C, L)
    err = jnp.max(jnp.abs(out - ref))
    assert jnp.allclose(out, ref, atol=1e-4, rtol=1e-4), f"max abs err {err}"

    print("KERNEL_OK")
</pallas_src>

<mosaic_0001>
module attributes {stable_mosaic.version = 11 : i64} {
  func.func @_residual_block_kernel(%arg0: i32, %arg1: memref<1x4x16xf32, #tpu.memory_space<vmem>>, %arg2: memref<4x12xf32, #tpu.memory_space<vmem>>, %arg3: memref<4x12xf32, #tpu.memory_space<vmem>>, %arg4: memref<1x4x16xf32, #tpu.memory_space<vmem>>) attributes {dimension_semantics = [#tpu.dimension_semantics<parallel>], iteration_bounds = array<i64: 2>, scalar_prefetch = 0 : i64, scratch_operands = 0 : i64, tpu.core_type = #tpu.core_type<tc>, window_params = [{transform_indices = @transform_0, window_bounds = array<i64: 1, 4, 16>}, {pipeline_mode = #tpu.pipeline_mode<synchronous>, transform_indices = @transform_1, window_bounds = array<i64: 4, 12>}, {pipeline_mode = #tpu.pipeline_mode<synchronous>, transform_indices = @transform_2, window_bounds = array<i64: 4, 12>}, {transform_indices = @transform_3, window_bounds = array<i64: 1, 4, 16>}]} {
    %c0 = arith.constant 0 : index
    %c0_0 = arith.constant 0 : index
    %0 = vector.load %arg2[%c0, %c0_0] : memref<4x12xf32, #tpu.memory_space<vmem>>, vector<4x12xf32>
    %c0_1 = arith.constant 0 : index
    %c0_2 = arith.constant 0 : index
    %1 = vector.load %arg3[%c0_1, %c0_2] : memref<4x12xf32, #tpu.memory_space<vmem>>, vector<4x12xf32>
    %c0_3 = arith.constant 0 : index
    %c0_4 = arith.constant 0 : index
    %c0_5 = arith.constant 0 : index
    %2 = vector.load %arg1[%c0_3, %c0_4, %c0_5] : memref<1x4x16xf32, #tpu.memory_space<vmem>>, vector<1x4x16xf32>
    %3 = vector.shape_cast %2 : vector<1x4x16xf32> to vector<4x16xf32>
    %4 = vector.extract_strided_slice %3 {offsets = [0, 1], sizes = [4, 1], strides = [1, 1]} : vector<4x16xf32> to vector<4x1xf32>
    %5 = vector.extract_strided_slice %3 {offsets = [0, 0], sizes = [4, 15], strides = [1, 1]} : vector<4x16xf32> to vector<4x15xf32>
    %6 = tpu.concatenate %4, %5 in 1 : vector<4x1xf32>, vector<4x15xf32> -> vector<4x16xf32>
    %7 = vector.extract_strided_slice %3 {offsets = [0, 1], sizes = [4, 15], strides = [1, 1]} : vector<4x16xf32> to vector<4x15xf32>
    %8 = vector.extract_strided_slice %3 {offsets = [0, 14], sizes = [4, 1], strides = [1, 1]} : vector<4x16xf32> to vector<4x1xf32>
    %9 = tpu.concatenate %7, %8 in 1 : vector<4x15xf32>, vector<4x1xf32> -> vector<4x16xf32>
    %10 = tpu.concatenate %6, %3, %9 in 0 : vector<4x16xf32>, vector<4x16xf32>, vector<4x16xf32> -> vector<12x16xf32>
    %cst = arith.constant dense<0.000000e+00> : vector<4x16xf32>
    %11 = tpu.matmul %0, %10, %cst {dimension_numbers = #tpu.dot_dimension_numbers<[1], [0], [0], [1], [0, 0, 1, 1], [], []>} : vector<4x12xf32>, vector<12x16xf32>, vector<4x16xf32> -> vector<4x16xf32>
    %cst_6 = arith.constant dense<0.000000e+00> : vector<4xf32>
    %12 = vector.multi_reduction <add>, %11, %cst_6 [1] : vector<4x16xf32> to vector<4xf32>
    %13 = vector.shape_cast %12 : vector<4xf32> to vector<4x1xf32>
    %14 = arith.mulf %11, %11 : vector<4x16xf32>
    %cst_7 = arith.constant dense<0.000000e+00> : vector<4xf32>
    %15 = vector.multi_reduction <add>, %14, %cst_7 [1] : vector<4x16xf32> to vector<4xf32>
    %16 = vector.shape_cast %15 : vector<4xf32> to vector<4x1xf32>
    %cst_8 = arith.constant 6.250000e-02 : f32
    %17 = vector.broadcast %cst_8 : f32 to vector<4x1xf32>
    %18 = arith.mulf %13, %17 : vector<4x1xf32>
    %cst_9 = arith.constant 6.250000e-02 : f32
    %19 = vector.broadcast %cst_9 : f32 to vector<4x1xf32>
    %20 = arith.mulf %16, %19 : vector<4x1xf32>
    %21 = arith.mulf %18, %18 : vector<4x1xf32>
    %22 = arith.subf %20, %21 : vector<4x1xf32>
    %cst_10 = arith.constant 0.000000e+00 : f32
    %23 = vector.broadcast %cst_10 : f32 to vector<4x1xf32>
    %24 = arith.maximumf %22, %23 : vector<4x1xf32>
    %25 = vector.broadcast %18 : vector<4x1xf32> to vector<4x16xf32>
    %26 = arith.subf %11, %25 : vector<4x16xf32>
    %cst_11 = arith.constant 9.99999974E-6 : f32
    %27 = vector.broadcast %cst_11 : f32 to vector<4x1xf32>
    %28 = arith.addf %24, %27 : vector<4x1xf32>
    %29 = math.rsqrt %28 : vector<4x1xf32>
    %30 = vector.broadcast %29 : vector<4x1xf32> to vector<4x16xf32>
    %31 = arith.mulf %26, %30 : vector<4x16xf32>
    %cst_12 = arith.constant 0.000000e+00 : f32
    %32 = vector.broadcast %cst_12 : f32 to vector<4x16xf32>
    %33 = arith.maximumf %31, %32 : vector<4x16xf32>
    %34 = vector.extract_strided_slice %33 {offsets = [0, 1], sizes = [4, 1], strides = [1, 1]} : vector<4x16xf32> to vector<4x1xf32>
    %35 = vector.extract_strided_slice %33 {offsets = [0, 0], sizes = [4, 15], strides = [1, 1]} : vector<4x16xf32> to vector<4x15xf32>
    %36 = tpu.concatenate %34, %35 in 1 : vector<4x1xf32>, vector<4x15xf32> -> vector<4x16xf32>
    %37 = vector.extract_strided_slice %33 {offsets = [0, 1], sizes = [4, 15], strides = [1, 1]} : vector<4x16xf32> to vector<4x15xf32>
    %38 = vector.extract_strided_slice %33 {offsets = [0, 14], sizes = [4, 1], strides = [1, 1]} : vector<4x16xf32> to vector<4x1xf32>
    %39 = tpu.concatenate %37, %38 in 1 : vector<4x15xf32>, vector<4x1xf32> -> vector<4x16xf32>
    %40 = tpu.concatenate %36, %33, %39 in 0 : vector<4x16xf32>, vector<4x16xf32>, vector<4x16xf32> -> vector<12x16xf32>
    %cst_13 = arith.constant dense<0.000000e+00> : vector<4x16xf32>
    %41 = tpu.matmul %1, %40, %cst_13 {dimension_numbers = #tpu.dot_dimension_numbers<[1], [0], [0], [1], [0, 0, 1, 1], [], []>} : vector<4x12xf32>, vector<12x16xf32>, vector<4x16xf32> -> vector<4x16xf32>
    %cst_14 = arith.constant dense<0.000000e+00> : vector<4xf32>
    %42 = vector.multi_reduction <add>, %41, %cst_14 [1] : vector<4x16xf32> to vector<4xf32>
    %43 = vector.shape_cast %42 : vector<4xf32> to vector<4x1xf32>
    %44 = arith.mulf %41, %41 : vector<4x16xf32>
    %cst_15 = arith.constant dense<0.000000e+00> : vector<4xf32>
    %45 = vector.multi_reduction <add>, %44, %cst_15 [1] : vector<4x16xf32> to vector<4xf32>
    %46 = vector.shape_cast %45 : vector<4xf32> to vector<4x1xf32>
    %cst_16 = arith.constant 6.250000e-02 : f32
    %47 = vector.broadcast %cst_16 : f32 to vector<4x1xf32>
    %48 = arith.mulf %43, %47 : vector<4x1xf32>
    %cst_17 = arith.constant 6.250000e-02 : f32
    %49 = vector.broadcast %cst_17 : f32 to vector<4x1xf32>
    %50 = arith.mulf %46, %49 : vector<4x1xf32>
    %51 = arith.mulf %48, %48 : vector<4x1xf32>
    %52 = arith.subf %50, %51 : vector<4x1xf32>
    %cst_18 = arith.constant 0.000000e+00 : f32
    %53 = vector.broadcast %cst_18 : f32 to vector<4x1xf32>
    %54 = arith.maximumf %52, %53 : vector<4x1xf32>
    %55 = vector.broadcast %48 : vector<4x1xf32> to vector<4x16xf32>
    %56 = arith.subf %41, %55 : vector<4x16xf32>
    %cst_19 = arith.constant 9.99999974E-6 : f32
    %57 = vector.broadcast %cst_19 : f32 to vector<4x1xf32>
    %58 = arith.addf %54, %57 : vector<4x1xf32>
    %59 = math.rsqrt %58 : vector<4x1xf32>
    %60 = vector.broadcast %59 : vector<4x1xf32> to vector<4x16xf32>
    %61 = arith.mulf %56, %60 : vector<4x16xf32>
    %62 = arith.addf %3, %61 : vector<4x16xf32>
    %c0_20 = arith.constant 0 : index
    %c0_21 = arith.constant 0 : index
    %c0_22 = arith.constant 0 : index
    %63 = vector.load %arg4[%c0_20, %c0_21, %c0_22] : memref<1x4x16xf32, #tpu.memory_space<vmem>>, vector<1x4x16xf32>
    %64 = vector.shape_cast %63 : vector<1x4x16xf32> to vector<4x16xf32>
    %65 = vector.shape_cast %62 : vector<4x16xf32> to vector<1x4x16xf32>
    tpu.vector_store %arg4[%c0_20, %c0_21, %c0_22], %65 {strides = array<i32>} : memref<1x4x16xf32, #tpu.memory_space<vmem>>, vector<1x4x16xf32>,
    return
  }
  func.func @transform_0(%arg0: i32) -> (i32, i32, i32) {
    %c0_i32 = arith.constant 0 : i32
    %c0_i32_0 = arith.constant 0 : i32
    %c0_i32_1 = arith.constant 0 : i32
    return %arg0, %c0_i32, %c0_i32_0 : i32, i32, i32
  }
  func.func @transform_1(%arg0: i32) -> (i32, i32) {
    %c0_i32 = arith.constant 0 : i32
    %c0_i32_0 = arith.constant 0 : i32
    %c0_i32_1 = arith.constant 0 : i32
    return %c0_i32, %c0_i32_0 : i32, i32
  }
  func.func @transform_2(%arg0: i32) -> (i32, i32) {
    %c0_i32 = arith.constant 0 : i32
    %c0_i32_0 = arith.constant 0 : i32
    %c0_i32_1 = arith.constant 0 : i32
    return %c0_i32, %c0_i32_0 : i32, i32
  }
  func.func @transform_3(%arg0: i32) -> (i32, i32, i32) {
    %c0_i32 = arith.constant 0 : i32
    %c0_i32_0 = arith.constant 0 : i32
    %c0_i32_1 = arith.constant 0 : i32
    return %arg0, %c0_i32, %c0_i32_0 : i32, i32, i32
  }
}

</mosaic_0001>

<llo_original>
// kernel: tpu_custom_call.1
$region0: #{tpu_custom_call.1}
  #allocation0 [shape = 'u32[]', space=smem, size = 0x4, offset = 0x4, fixed_abs, tag = 'smem constant byte address 0x4 - core index']
  #allocation1 [shape = 'u32[144,128]{1,0:T(1,128)}', space=vmem, size = 0x12000, scoped, tag = 'internal scratch']
  %s0 = inlined_call_operand.hbm [shape: f32[2,4,16], index: 0, kind: input, shape index: {}]
  %s1 = inlined_call_operand.hbm [shape: f32[4,12], index: 1, kind: input, shape index: {}]
  %s2 = inlined_call_operand.hbm [shape: f32[4,12], index: 2, kind: input, shape index: {}]
  %s3 = inlined_call_operand.hbm [shape: f32[2,4,16], index: 3, kind: output, shape index: {}]
  %s4 = sld [smem:[#allocation0]]
  $region57: #{tpu_custom_call.1} parent=0
    _
  %s6 = ssub.s32 1, %s4
  %s7 = scalar_select 0, %s6, %s4
  $region1: #{tpu_custom_call.1} parent=0
    #allocation2 [shape = 'u8[4096]{0}', space=vmem, size = 0x1000, scoped, tag = 'input window, operand 0']
    #allocation3 [shape = 's32[2]{0}', space=sflag, size = 0x8, scoped, tag = 'scoped memory for tpu_custom_call.1']
    #allocation4 [shape = 's32[2]{0}', space=sflag, size = 0x8, scoped, tag = 'scoped memory for tpu_custom_call.1']
    #allocation5 [shape = 'u8[2048]{0}', space=vmem, size = 0x800, scoped, tag = 'input window, operand 1, single buffered']
    #allocation6 [shape = 's32[1]{0}', space=sflag, size = 0x4, scoped, tag = 'scoped memory for tpu_custom_call.1']
    #allocation7 [shape = 'u8[2048]{0}', space=vmem, size = 0x800, scoped, tag = 'input window, operand 2, single buffered']
    #allocation8 [shape = 'u8[4096]{0}', space=vmem, size = 0x1000, scoped, tag = 'output window, operand 0']
    %8 = vsyncpa [#allocation3], 0
    %s9 = scalar_lea.sflag [#allocation3], 1
    %10 = vsyncpa %s9, 0
    %11 = vsyncpa [#allocation6], 0
    %12 = vsyncpa [#allocation4], 0
    %s13 = scalar_lea.sflag [#allocation4], 1
    %14 = vsyncpa %s13, 0
    loop: start=0, step=1, limit=4
    $region2: #{tpu_custom_call.1} parent=1 // loop_pre_header
      _
    $region3: #{tpu_custom_call.1} parent=1 // loop_header
      %s16 = sphi 0, %s20
      %p17 = scmp.ge.s32.totalorder %s16, 4
      %s26 = sphi 0, %s28
      %s29 = sphi 0, %s26
      %s30 = sphi 0, %s29
      %s46 = sphi 0, %s30
      %s50 = sphi 0, %s50
      %s52 = sphi 0, %s50
      %s53 = sphi 0, %s52
      %s67 = sphi 0, %s53
      %s71 = sphi 0, %s71
      %s73 = sphi 0, %s71
      %s74 = sphi 0, %s73
      %s88 = sphi 0, %s74
      %s94 = sphi 0, %s96
      %s97 = sphi 0, %s94
      %s98 = sphi 0, %s97
      %s114 = sphi 0, %s98
    $region4: #{tpu_custom_call.1} parent=1 // loop_header_branch
      %19 = sbr.rel (%p17) target = $region8
    $region5: #{tpu_custom_call.1} parent=1 // loop_body
      %s21 = ssub.s32 %s16, 1
      %s22 = ssub.s32 %s16, 2
      %s23 = sadd.s32 %s16, 1
      %s24 = ssub.s32 %s16, %s23
      %p25 = scmp.eq.s32.totalorder %s24, 0
      %s27 = sadd.s32 %s26, 1
      %s28 = scalar_select %p25, %s26, %s27
      %p31 = pneg %p25
      %p32 = scmp.eq.s32.totalorder %s16, 1
      %p33 = por %p31, %p32
      %p34 = scmp.ne.s32.totalorder %s26, %s29
      %p35 = scmp.eq.s32.totalorder %s16, 0
      %p36 = por %p34, %p35
      %p37 = scmp.ne.s32.totalorder %s26, %s29
      %p38 = scmp.eq.s32.totalorder %s21, 1
      %p39 = por %p37, %p38
      %p40 = scmp.ne.s32.totalorder %s29, %s30
      %p41 = scmp.eq.s32.totalorder %s21, 0
      %p42 = por %p40, %p41
      %p43 = scmp.ne.s32.totalorder %s29, %s30
      %p44 = scmp.eq.s32.totalorder %s22, 1
      %p45 = por %p43, %p44
      %p47 = scmp.ne.s32.totalorder %s30, %s46
      %p48 = scmp.eq.s32.totalorder %s22, 0
      %p49 = por %p47, %p48
      %s51 = sadd.s32 %s50, 1
      %p54 = scmp.eq.s32.totalorder %s16, 1
      %p55 = scmp.ne.s32.totalorder %s50, %s52
      %p56 = scmp.eq.s32.totalorder %s16, 0
      %p57 = por %p55, %p56
      %p58 = scmp.ne.s32.totalorder %s50, %s52
      %p59 = scmp.eq.s32.totalorder %s21, 1
      %p60 = por %p58, %p59
      %p61 = scmp.ne.s32.totalorder %s52, %s53
      %p62 = scmp.eq.s32.totalorder %s21, 0
      %p63 = por %p61, %p62
      %p64 = scmp.ne.s32.totalorder %s52, %s53
      %p65 = scmp.eq.s32.totalorder %s22, 1
      %p66 = por %p64, %p65
      %p68 = scmp.ne.s32.totalorder %s53, %s67
      %p69 = scmp.eq.s32.totalorder %s22, 0
      %p70 = por %p68, %p69
      %s72 = sadd.s32 %s71, 1
      %p75 = scmp.eq.s32.totalorder %s16, 1
      %p76 = scmp.ne.s32.totalorder %s71, %s73
      %p77 = scmp.eq.s32.totalorder %s16, 0
      %p78 = por %p76, %p77
      %p79 = scmp.ne.s32.totalorder %s71, %s73
      %p80 = scmp.eq.s32.totalorder %s21, 1
      %p81 = por %p79, %p80
      %p82 = scmp.ne.s32.totalorder %s73, %s74
      %p83 = scmp.eq.s32.totalorder %s21, 0
      %p84 = por %p82, %p83
      %p85 = scmp.ne.s32.totalorder %s73, %s74
      %p86 = scmp.eq.s32.totalorder %s22, 1
      %p87 = por %p85, %p86
      %p89 = scmp.ne.s32.totalorder %s74, %s88
      %p90 = scmp.eq.s32.totalorder %s22, 0
      %p91 = por %p89, %p90
      %s92 = ssub.s32 %s16, %s23
      %p93 = scmp.eq.s32.totalorder %s92, 0
      %s95 = sadd.s32 %s94, 1
      %s96 = scalar_select %p93, %s94, %s95
      %p99 = pneg %p93
      %p100 = scmp.eq.s32.totalorder %s16, 1
      %p101 = por %p99, %p100
      %p102 = scmp.ne.s32.totalorder %s94, %s97
      %p103 = scmp.eq.s32.totalorder %s16, 0
      %p104 = por %p102, %p103
      %p105 = scmp.ne.s32.totalorder %s94, %s97
      %p106 = scmp.eq.s32.totalorder %s21, 1
      %p107 = por %p105, %p106
      %p108 = scmp.ne.s32.totalorder %s97, %s98
      %p109 = scmp.eq.s32.totalorder %s21, 0
      %p110 = por %p108, %p109
      %p111 = scmp.ne.s32.totalorder %s97, %s98
      %p112 = scmp.eq.s32.totalorder %s22, 1
      %p113 = por %p111, %p112
      %p115 = scmp.ne.s32.totalorder %s98, %s114
      %p116 = scmp.eq.s32.totalorder %s22, 0
      %p117 = por %p115, %p116
      %p118 = scmp.le.s32.totalorder 1, %s16
      %p119 = scmp.lt.s32.totalorder %s16, 3
      %p120 = pnand %p118, %p119
      %p121 = pneg %p120
      // Predicated region
      $region9: #{tpu_custom_call.1} parent=5 // pred_check
        _
      $region10: #{tpu_custom_call.1} parent=5 // pred_check_branch
        %123 = sbr.rel (%p120) target = $region12
      $region11: #{tpu_custom_call.1} parent=5 // pred_region
        %s124 = ssub.s32 %s16, 1
        // Predicated region
        $region13: #{tpu_custom_call.1} parent=11 // pred_check
          %p125 = pneg %p63
        $region14: #{tpu_custom_call.1} parent=11 // pred_check_branch
          %127 = sbr.rel (%p125) target = $region16
        $region15: #{tpu_custom_call.1} parent=11 // pred_region
          %s129 = ssub.s32 64, 64
          %130 = vsyncadd [#allocation6], %s129
          %s132 = sshll.u32 [#allocation5], 4
          %s133 = int_to_ptr.vmem [resolvable:$true] %s132
          %135 = dma.hbm_to_vmem [thread:$0]  %s1, 64, %s133, [#allocation6]
        $region16: #{tpu_custom_call.1} parent=11 // pred_fallthru
          _
        // Predicated region
        $region17: #{tpu_custom_call.1} parent=11 // pred_check
          %p136 = pneg %p84
        $region18: #{tpu_custom_call.1} parent=11 // pred_check_branch
          %138 = sbr.rel (%p136) target = $region20
        $region19: #{tpu_custom_call.1} parent=11 // pred_region
          %s140 = ssub.s32 64, 64
          %141 = vsyncadd [#allocation6], %s140
          %s143 = sshll.u32 [#allocation7], 4
          %s144 = int_to_ptr.vmem [resolvable:$true] %s143
          %146 = dma.hbm_to_vmem [thread:$0]  %s2, 64, %s144, [#allocation6]
        $region20: #{tpu_custom_call.1} parent=11 // pred_fallthru
          _
      $region12: #{tpu_custom_call.1} parent=5 // pred_fallthru
        _
      %p147 = scmp.lt.s32.totalorder %s16, 2
      // Predicated region
      $region21: #{tpu_custom_call.1} parent=5 // pred_check
        %p148 = pneg %p147
      $region22: #{tpu_custom_call.1} parent=5 // pred_check_branch
        %150 = sbr.rel (%p148) target = $region24
      $region23: #{tpu_custom_call.1} parent=5 // pred_region
        // Predicated region
        $region25: #{tpu_custom_call.1} parent=23 // pred_check
          %p151 = pneg %p36
        $region26: #{tpu_custom_call.1} parent=23 // pred_check_branch
          %153 = sbr.rel (%p151) target = $region28
        $region27: #{tpu_custom_call.1} parent=23 // pred_region
          %s154 = sand.u32 %s26, 1
          %s155 = scalar_lea.sflag [#allocation3], %s154
          %s156 = sand.u32 %s26, 1
          %s157 = smul.addr %s156, 4
          %s158 = scalar_lea.vmem [#allocation2], %s157
          %s160 = ssub.s32 64, 64
          %161 = vsyncadd %s155, %s160
          %s162 = smul.addr %s16, 64
          %s163 = scalar_lea.hbm %s0, %s162
          %s165 = sshll.u32 %s158, 4
          %s166 = int_to_ptr.vmem [resolvable:$true] %s165
          %168 = dma.hbm_to_vmem [thread:$0]  %s163, 64, %s166, %s155
        $region28: #{tpu_custom_call.1} parent=23 // pred_fallthru
          _
      $region24: #{tpu_custom_call.1} parent=5 // pred_fallthru
        _
      %p169 = scmp.le.s32.totalorder 1, %s16
      %p170 = scmp.lt.s32.totalorder %s16, 3
      %p171 = pnand %p169, %p170
      %p172 = pneg %p171
      // Predicated region
      $region29: #{tpu_custom_call.1} parent=5 // pred_check
        _
      $region30: #{tpu_custom_call.1} parent=5 // pred_check_branch
        %174 = sbr.rel (%p171) target = $region32
      $region31: #{tpu_custom_call.1} parent=5 // pred_region
        %s175 = ssub.s32 %s16, 1
        %s176 = sand.u32 %s29, 1
        %s177 = scalar_lea.sflag [#allocation3], %s176
        %s178 = sand.u32 %s29, 1
        %s179 = smul.addr %s178, 4
        %s180 = scalar_lea.vmem [#allocation2], %s179
        // Predicated region
        $region33: #{tpu_custom_call.1} parent=31 // pred_check
          %p181 = pneg %p42
        $region34: #{tpu_custom_call.1} parent=31 // pred_check_branch
          %183 = sbr.rel (%p181) target = $region36
        $region35: #{tpu_custom_call.1} parent=31 // pred_region
          %184 = dma.done %s177, 64
        $region36: #{tpu_custom_call.1} parent=31 // pred_fallthru
          _
        // Predicated region
        $region37: #{tpu_custom_call.1} parent=31 // pred_check
          %p185 = pneg %p63
        $region38: #{tpu_custom_call.1} parent=31 // pred_check_branch
          %187 = sbr.rel (%p185) target = $region40
        $region39: #{tpu_custom_call.1} parent=31 // pred_region
          %188 = dma.done [#allocation6], 64
        $region40: #{tpu_custom_call.1} parent=31 // pred_fallthru
          _
        // Predicated region
        $region41: #{tpu_custom_call.1} parent=31 // pred_check
          %p189 = pneg %p84
        $region42: #{tpu_custom_call.1} parent=31 // pred_check_branch
          %191 = sbr.rel (%p189) target = $region44
        $region43: #{tpu_custom_call.1} parent=31 // pred_region
          %192 = dma.done [#allocation6], 64
        $region44: #{tpu_custom_call.1} parent=31 // pred_fallthru
          _
        %s193 = sand.u32 %s29, 1
        %s194 = scalar_lea.sflag [#allocation3], %s193
        %s195 = sand.u32 %s29, 1
        %s196 = smul.addr %s195, 4
        %s197 = scalar_lea.vmem [#allocation2], %s196
        %p198 = pneg %p42
        %p199 = pneg %p39
        %p200 = pneg %p63
        %p201 = pneg %p60
        %p202 = pneg %p84
        %p203 = pneg %p81
        %p204 = pneg %p110
        %p205 = pneg %p107
        %s206 = sand.u32 %s97, 1
        %s207 = scalar_lea.sflag [#allocation4], %s206
        %s208 = sand.u32 %s97, 1
        %s209 = smul.addr %s208, 4
        %s210 = scalar_lea.vmem [#allocation8], %s209
        %v211 = vld [vmem:[#allocation5] sm:$0xf]
        %v212 = vld [vmem:[#allocation7] sm:$0xf]
        %v213 = vld [vmem:[%s180] sm:$0xf]
        %215 = vrot.lane.b32.xlu0 %v213, 127
        %v216 = vpop.permute.xlu0 %215
        %218 = vrot.lane.b32.xlu0 %v213, 1
        %v219 = vpop.permute.xlu0 %218
        %vm221 = vcmask 7168
        %v222 = vsel %vm221, %v216, %v219
        %vm223 = vcmask 121856
        %v224 = vsel %vm223, %v216, %v219
        %v225 = vrot.slane %v213, 4
        %vm227 = vcmask 1043456
        %v228 = vsel %vm227, %v222, %v225
        %vm229 = vcmask 97280
        %v231 = vsel %vm229, %v211, 0
        %v234 = vsel %vm227, %v224, 0
        %236 = vmatprep.subr.mxu0 0.0
        %237 = vmatpush1.msra.mxu0 0.0
        %238 = vmatprep.subr.mxu0 0.0
        %239 = vmatpush1.msra.mxu0 0.0
        %240 = vmatprep.subr.mxu0 0.0
        %241 = vmatpush1.msra.mxu0 0.0
        %242 = vmatprep.subr.mxu0 0.0
        %243 = vmatpush1.msra.mxu0 0.0
        %244 = vmatprep.subr.mxu0 0.0
        %245 = vmatpush1.msra.mxu0 0.0
        %246 = vmatprep.subr.mxu0 0.0
        %247 = vmatpush1.msra.mxu0 0.0
        %248 = vmatprep.subr.mxu0 0.0
        %249 = vmatpush1.msra.mxu0 0.0
        %250 = vmatprep.subr.mxu0 0.0
        %251 = vmatpush1.msra.mxu0 0.0
        %252 = vmatprep.subr.mxu0 0.0
        %253 = vmatpush1.msra.mxu0 0.0
        %254 = vmatprep.subr.mxu0 0.0
        %255 = vmatpush1.msra.mxu0 0.0
        %256 = vmatprep.subr.mxu0 0.0
        %257 = vmatpush1.msra.mxu0 0.0
        %258 = vmatprep.subr.mxu0 0.0
        %259 = vmatpush1.msra.mxu0 0.0
        %260 = vmatprep.subr.mxu0 0.0
        %261 = vmatpush1.msra.mxu0 0.0
        %262 = vmatprep.subr.mxu0 0.0
        %263 = vmatpush1.msra.mxu0 0.0
        %264 = vmatprep.subr.mxu0 0.0
        %265 = vmatpush1.msra.mxu0 %v234
        %266 = vmatprep.subr.mxu0 0.0
        %267 = vmatpush1.msra.mxu0 %v228
        %268 = vmatprep.subr.mxu0 0.0
        %269 = vmatpush2.msra.mxu0 0.0
        %270 = vmatprep.subr.mxu0 0.0
        %271 = vmatpush2.msra.mxu0 0.0
        %272 = vmatprep.subr.mxu0 0.0
        %273 = vmatpush2.msra.mxu0 0.0
        %274 = vmatprep.subr.mxu0 0.0
        %275 = vmatpush2.msra.mxu0 0.0
        %276 = vmatprep.subr.mxu0 0.0
        %277 = vmatpush2.msra.mxu0 0.0
        %278 = vmatprep.subr.mxu0 0.0
        %279 = vmatpush2.msra.mxu0 0.0
        %280 = vmatprep.subr.mxu0 0.0
        %281 = vmatpush2.msra.mxu0 0.0
        %282 = vmatprep.subr.mxu0 0.0
        %283 = vmatpush2.msra.mxu0 0.0
        %284 = vmatprep.subr.mxu0 0.0
        %285 = vmatpush2.msra.mxu0 0.0
        %286 = vmatprep.subr.mxu0 0.0
        %287 = vmatpush2.msra.mxu0 0.0
        %288 = vmatprep.subr.mxu0 0.0
        %289 = vmatpush2.msra.mxu0 0.0
        %290 = vmatprep.subr.mxu0 0.0
        %291 = vmatpush2.msra.mxu0 0.0
        %292 = vmatprep.subr.mxu0 0.0
        %293 = vmatpush2.msra.mxu0 0.0
        %294 = vmatprep.subr.mxu0 0.0
        %295 = vmatpush2.msra.mxu0 0.0
        %296 = vmatprep.subr.mxu0 0.0
        %297 = vmatpush2.msra.mxu0 0.0
        %298 = vmatprep.subr.mxu0 0.0
        %299 = vmatpush2.msra.mxu0 0.0
        %300 = vmatprep.mubr.f32.mxu0 0.0
        %301 = vmatmul.mubr.f32.gmra.mxu0 %v231
        %v302 = vpop.f32.mrf.mxu0
        %v303 = vadd.f32 0.0, %v302
        %v304 = vpop.f32.mrf.mxu0
        %305 = vdwg.mxu0
        %vm306 = vcmask 125952
        %v307 = vsel %vm306, %v303, 0.0
        %308 = vadd.xlane.f32.xlu0 %v307
        %v309 = vpop.xlane.xlu0 %308
        %v310 = vmul.f32 %v303, %v303
        %v311 = vsel %vm306, %v310, 0.0
        %312 = vadd.xlane.f32.xlu0 %v311
        %v313 = vpop.xlane.xlu0 %312
        %v314 = vmul.f32 %v309, 0.0625
        %v315 = vmul.f32 %v313, 0.0625
        %v316 = vmul.f32 %v314, %v314
        %v317 = vsub.f32 %v315, %v316
        %v318 = vmax.f32 %v317, 0.0
        %v319 = vsub.f32 %v303, %v314
        %v320 = vadd.f32 %v318, 1e-05
        %v321 = vrsqrt.pop %v320
        %v322 = vmul.f32 %v319, %v321
        %v323 = vmax.f32 %v322, 0.0
        %325 = vrot.lane.b32.xlu0 %v323, 127
        %v326 = vpop.permute.xlu0 %325
        %328 = vrot.lane.b32.xlu0 %v323, 1
        %v329 = vpop.permute.xlu0 %328
        %v331 = vsel %vm221, %v326, %v329
        %v332 = vsel %vm223, %v326, %v329
        %v333 = vrot.slane %v323, 4
        %v335 = vsel %vm227, %v331, %v333
        %v337 = vsel %vm229, %v212, 0
        %v340 = vsel %vm227, %v332, 0
        %342 = vmatprep.subr.mxu0 0.0
        %343 = vmatpush1.msra.mxu0 0.0
        %344 = vmatprep.subr.mxu0 0.0
        %345 = vmatpush1.msra.mxu0 0.0
        %346 = vmatprep.subr.mxu0 0.0
        %347 = vmatpush1.msra.mxu0 0.0
        %348 = vmatprep.subr.mxu0 0.0
        %349 = vmatpush1.msra.mxu0 0.0
        %350 = vmatprep.subr.mxu0 0.0
        %351 = vmatpush1.msra.mxu0 0.0
        %352 = vmatprep.subr.mxu0 0.0
        %353 = vmatpush1.msra.mxu0 0.0
        %354 = vmatprep.subr.mxu0 0.0
        %355 = vmatpush1.msra.mxu0 0.0
        %356 = vmatprep.subr.mxu0 0.0
        %357 = vmatpush1.msra.mxu0 0.0
        %358 = vmatprep.subr.mxu0 0.0
        %359 = vmatpush1.msra.mxu0 0.0
        %360 = vmatprep.subr.mxu0 0.0
        %361 = vmatpush1.msra.mxu0 0.0
        %362 = vmatprep.subr.mxu0 0.0
        %363 = vmatpush1.msra.mxu0 0.0
        %364 = vmatprep.subr.mxu0 0.0
        %365 = vmatpush1.msra.mxu0 0.0
        %366 = vmatprep.subr.mxu0 0.0
        %367 = vmatpush1.msra.mxu0 0.0
        %368 = vmatprep.subr.mxu0 0.0
        %369 = vmatpush1.msra.mxu0 0.0
        %370 = vmatprep.subr.mxu0 0.0
        %371 = vmatpush1.msra.mxu0 %v340
        %372 = vmatprep.subr.mxu0 0.0
        %373 = vmatpush1.msra.mxu0 %v335
        %374 = vmatprep.subr.mxu0 0.0
        %375 = vmatpush2.msra.mxu0 0.0
        %376 = vmatprep.subr.mxu0 0.0
        %377 = vmatpush2.msra.mxu0 0.0
        %378 = vmatprep.subr.mxu0 0.0
        %379 = vmatpush2.msra.mxu0 0.0
        %380 = vmatprep.subr.mxu0 0.0
        %381 = vmatpush2.msra.mxu0 0.0
        %382 = vmatprep.subr.mxu0 0.0
        %383 = vmatpush2.msra.mxu0 0.0
        %384 = vmatprep.subr.mxu0 0.0
        %385 = vmatpush2.msra.mxu0 0.0
        %386 = vmatprep.subr.mxu0 0.0
        %387 = vmatpush2.msra.mxu0 0.0
        %388 = vmatprep.subr.mxu0 0.0
        %389 = vmatpush2.msra.mxu0 0.0
        %390 = vmatprep.subr.mxu0 0.0
        %391 = vmatpush2.msra.mxu0 0.0
        %392 = vmatprep.subr.mxu0 0.0
        %393 = vmatpush2.msra.mxu0 0.0
        %394 = vmatprep.subr.mxu0 0.0
        %395 = vmatpush2.msra.mxu0 0.0
        %396 = vmatprep.subr.mxu0 0.0
        %397 = vmatpush2.msra.mxu0 0.0
        %398 = vmatprep.subr.mxu0 0.0
        %399 = vmatpush2.msra.mxu0 0.0
        %400 = vmatprep.subr.mxu0 0.0
        %401 = vmatpush2.msra.mxu0 0.0
        %402 = vmatprep.subr.mxu0 0.0
        %403 = vmatpush2.msra.mxu0 0.0
        %404 = vmatprep.subr.mxu0 0.0
        %405 = vmatpush2.msra.mxu0 0.0
        %406 = vmatprep.mubr.f32.mxu0 0.0
        %407 = vmatmul.mubr.f32.gmra.mxu0 %v337
        %v408 = vpop.f32.mrf.mxu0
        %v409 = vadd.f32 0.0, %v408
        %v410 = vpop.f32.mrf.mxu0
        %411 = vdwg.mxu0
        %v412 = vsel %vm306, %v409, 0.0
        %413 = vadd.xlane.f32.xlu0 %v412
        %v414 = vpop.xlane.xlu0 %413
        %v415 = vmul.f32 %v409, %v409
        %v416 = vsel %vm306, %v415, 0.0
        %417 = vadd.xlane.f32.xlu0 %v416
        %v418 = vpop.xlane.xlu0 %417
        %v419 = vmul.f32 %v414, 0.0625
        %v420 = vmul.f32 %v418, 0.0625
        %v421 = vmul.f32 %v419, %v419
        %v422 = vsub.f32 %v420, %v421
        %v423 = vmax.f32 %v422, 0.0
        %v424 = vsub.f32 %v409, %v419
        %v425 = vadd.f32 %v423, 1e-05
        %v426 = vrsqrt.pop %v425
        %v427 = vmul.f32 %v424, %v426
        %v428 = vadd.f32 %v213, %v427
        %429 = vst.msk [vmem:[%s210] sm:$0xf] %vm306, %v428
        %s430 = sand.u32 %s97, 1
        %s431 = scalar_lea.sflag [#allocation4], %s430
        %s432 = sand.u32 %s97, 1
        %s433 = smul.addr %s432, 4
        %s434 = scalar_lea.vmem [#allocation8], %s433
        // Predicated region
        $region45: #{tpu_custom_call.1} parent=31 // pred_check
          %p435 = pneg %p107
        $region46: #{tpu_custom_call.1} parent=31 // pred_check_branch
          %437 = sbr.rel (%p435) target = $region48
        $region47: #{tpu_custom_call.1} parent=31 // pred_region
          %s439 = ssub.s32 64, 64
          %440 = vsyncadd %s431, %s439
          %s441 = smul.addr %s21, 64
          %s442 = scalar_lea.hbm %s3, %s441
          %s444 = sshll.u32 %s434, 4
          %s445 = int_to_ptr.vmem [resolvable:$true] %s444
          %447 = dma.vmem_to_hbm [thread:$0]  %s445, 64, %s442, %s431
        $region48: #{tpu_custom_call.1} parent=31 // pred_fallthru
          _
      $region32: #{tpu_custom_call.1} parent=5 // pred_fallthru
        _
      %p448 = scmp.le.s32.totalorder 2, %s16
      // Predicated region
      $region49: #{tpu_custom_call.1} parent=5 // pred_check
        %p449 = pneg %p448
      $region50: #{tpu_custom_call.1} parent=5 // pred_check_branch
        %451 = sbr.rel (%p449) target = $region52
      $region51: #{tpu_custom_call.1} parent=5 // pred_region
        %s452 = ssub.s32 %s16, 2
        // Predicated region
        $region53: #{tpu_custom_call.1} parent=51 // pred_check
          %p453 = pneg %p113
        $region54: #{tpu_custom_call.1} parent=51 // pred_check_branch
          %455 = sbr.rel (%p453) target = $region56
        $region55: #{tpu_custom_call.1} parent=51 // pred_region
          %s456 = sand.u32 %s98, 1
          %s457 = scalar_lea.sflag [#allocation4], %s456
          %s458 = sand.u32 %s98, 1
          %s459 = smul.addr %s458, 4
          %s460 = scalar_lea.vmem [#allocation8], %s459
          %461 = dma.done %s457, 64
        $region56: #{tpu_custom_call.1} parent=51 // pred_fallthru
          _
      $region52: #{tpu_custom_call.1} parent=5 // pred_fallthru
        _
    $region6: #{tpu_custom_call.1} parent=1 // loop_footer
      %s20 = sadd.s32 1, %s16
    $region7: #{tpu_custom_call.1} parent=1 // loop_footer_branch
      %15 = sbr.rel target = $region3
    $region8: #{tpu_custom_call.1} parent=1 // loop_exit
      _
    %462 = vsyncpa [#allocation3], 1
    %s463 = scalar_lea.sflag [#allocation3], 1
    %464 = vsyncpa %s463, 1
    %465 = vsyncpa [#allocation6], 1
    %466 = vsyncpa [#allocation4], 1
    %s467 = scalar_lea.sflag [#allocation4], 1
    %468 = vsyncpa %s467, 1

</llo_original>
